<compile_context>
chip_gen: v7x
topology: tpu7x:2x2x1
jax: 0.10.0
libtpu: 0.0.40
codegen_flags: <defaults>
</compile_context>

<pallas_src>
import jax
import jax.numpy as jnp
from jax.experimental import pallas as pl
from jax.experimental.pallas import tpu as pltpu


def _mul_kernel(scale_ref, x_ref, o_ref):
    # scale_ref: (1,1) SMEM scalar; x_ref/o_ref: one lane-dense VMEM tile.
    scale = scale_ref[0, 0].astype(o_ref.dtype)
    o_ref[...] = x_ref[...].astype(o_ref.dtype) * scale


def _round_up(v: int, m: int) -> int:
    return -(-v // m) * m


def _plan_slab(total: int):
    """Pick a lane-dense (rows, cols) slab; cols is always a multiple of 128.

    Returns (rows, cols, pad_elems). pad_elems > 0 means the flattened input
    must be zero-padded before reshaping (and the output sliced afterwards).
    """
    if total % 128 == 0:
        cap = min(total, 8192)  # cap is a multiple of 128 here
        cols = 128
        for k in range(cap, 127, -128):
            if total % k == 0:
                cols = k
                break
        return total // cols, cols, 0
    # Ragged total: pad up to a full lane-dense slab, slice padding off after.
    cols = 1024 if total >= 1024 else 128
    rows = -(-total // cols)
    return rows, cols, rows * cols - total


def _tile_budget_bytes() -> int:
    """Per-tile VMEM budget (in + out each get a tile, double buffered)."""
    try:
        kind = jax.devices()[0].device_kind.lower()
    except Exception:
        kind = ""
    if ("v6" in kind) or ("v7" in kind):
        # 2 arrays x 2 buffers x ~6 MiB ~= 24 MiB, inside the 32 MiB scoped VMEM.
        return 6 * 1024 * 1024
    # v5e and older: stay well inside the 16 MiB default scoped limit.
    return int(3.5 * 1024 * 1024)


def _choose_tile_rows(rows: int, cols: int, itemsize: int, budget: int) -> int:
    """Row tile: multiple of 8, sized from the VMEM budget, guaranteeing >= 2
    grid steps whenever rows > 8 (software pipelining + v7x's second core)."""
    if rows <= 8:
        return rows  # single full-extent block (tiny input)
    tm_budget = max(8, (budget // (cols * itemsize)) // 8 * 8)
    tm_half = _round_up(-(-rows // 2), 8)  # cap so the grid has >= 2 steps
    return min(tm_budget, tm_half)


def mul_module(x: jax.Array, time) -> jax.Array:
    """Equivalent of MulModule(time).forward(x) == x * time."""
    out_dtype = jnp.result_type(x.dtype, time)

    if x.ndim == 0 or x.size == 0:
        return (x.astype(out_dtype) * jnp.asarray(time, out_dtype)).astype(out_dtype)

    if jnp.issubdtype(out_dtype, jnp.floating):
        smem_dtype = jnp.float32
    elif jnp.issubdtype(out_dtype, jnp.integer):
        smem_dtype = jnp.int32
    else:
        # Exotic dtypes (complex/bool): no benefit from a custom kernel.
        return x.astype(out_dtype) * jnp.asarray(time, out_dtype)

    orig_shape = x.shape
    total = x.size
    rows, cols, pad = _plan_slab(total)

    x_flat = x.reshape(-1)
    if pad:
        x_flat = jnp.pad(x_flat, (0, pad))
    x2d = x_flat.reshape(rows, cols)

    itemsize = max(jnp.dtype(x.dtype).itemsize, jnp.dtype(out_dtype).itemsize)
    tm = _choose_tile_rows(rows, cols, itemsize, _tile_budget_bytes())
    grid = (pl.cdiv(rows, tm),)  # partial last block is handled by Pallas

    scale = jnp.asarray(time, dtype=smem_dtype).reshape(1, 1)

    out2d = pl.pallas_call(
        _mul_kernel,
        out_shape=jax.ShapeDtypeStruct((rows, cols), out_dtype),
        grid=grid,
        in_specs=[
            pl.BlockSpec(memory_space=pltpu.MemorySpace.SMEM),  # runtime scalar
            pl.BlockSpec((tm, cols), lambda i: (i, 0)),
        ],
        out_specs=pl.BlockSpec((tm, cols), lambda i: (i, 0)),
        compiler_params=pltpu.CompilerParams(
            dimension_semantics=("parallel",),
            vmem_limit_bytes=32 * 1024 * 1024,
        ),
        # NOTE: input_output_aliases={1: 0} would halve peak HBM footprint but
        # needs caller-side donation and matching dtypes; intentionally omitted.
    )(scale, x2d)

    if pad:
        return out2d.reshape(-1)[:total].reshape(orig_shape)
    return out2d.reshape(orig_shape)


if __name__ == "__main__":
    key = jax.random.PRNGKey(0)
    # Small NCHW-style input consistent with a generic tensor passed to MulModule.
    x = jax.random.normal(key, (2, 4, 16, 16), dtype=jnp.float32)
    time_scalar = 3.5  # deterministic "parameter" from __init__

    out = jax.block_until_ready(mul_module(x, time_scalar))
    expected = x * time_scalar
    assert out.shape == x.shape, (out.shape, x.shape)
    assert out.dtype == expected.dtype, (out.dtype, expected.dtype)
    assert jnp.allclose(out, expected, atol=1e-6, rtol=1e-6)

    # Also exercise the ragged (non-multiple-of-128) padded path.
    x2 = jax.random.normal(jax.random.PRNGKey(0), (3, 5, 7), dtype=jnp.float32)
    out2 = jax.block_until_ready(mul_module(x2, time_scalar))
    assert jnp.allclose(out2, x2 * time_scalar, atol=1e-6, rtol=1e-6)

    print("KERNEL_OK")
</pallas_src>

<mosaic_0001>
module attributes {stable_mosaic.version = 11 : i64} {
  func.func @_mul_kernel(%arg0: i32, %arg1: memref<1x1xf32, #tpu.memory_space<smem>>, %arg2: memref<1x2048xf32, #tpu.memory_space<vmem>>, %arg3: memref<1x2048xf32, #tpu.memory_space<vmem>>) attributes {dimension_semantics = [#tpu.dimension_semantics<parallel>], iteration_bounds = array<i64: 1>, scalar_prefetch = 0 : i64, scratch_operands = 0 : i64, tpu.core_type = #tpu.core_type<tc>, window_params = [{transform_indices = @transform_0, window_bounds = array<i64: 1, 1>}, {transform_indices = @transform_1, window_bounds = array<i64: 1, 2048>}, {transform_indices = @transform_2, window_bounds = array<i64: 1, 2048>}]} {
    %c0 = arith.constant 0 : index
    %c0_0 = arith.constant 0 : index
    %0 = memref.load %arg1[%c0, %c0_0] : memref<1x1xf32, #tpu.memory_space<smem>>
    %c0_1 = arith.constant 0 : index
    %c0_2 = arith.constant 0 : index
    %1 = vector.load %arg2[%c0_1, %c0_2] : memref<1x2048xf32, #tpu.memory_space<vmem>>, vector<1x2048xf32>
    %2 = vector.broadcast %0 : f32 to vector<1x2048xf32>
    %3 = arith.mulf %1, %2 : vector<1x2048xf32>
    %c0_3 = arith.constant 0 : index
    %c0_4 = arith.constant 0 : index
    %4 = vector.load %arg3[%c0_3, %c0_4] : memref<1x2048xf32, #tpu.memory_space<vmem>>, vector<1x2048xf32>
    tpu.vector_store %arg3[%c0_3, %c0_4], %3 {strides = array<i32>} : memref<1x2048xf32, #tpu.memory_space<vmem>>, vector<1x2048xf32>,
    return
  }
  func.func @transform_0(%arg0: i32) -> (i32, i32) {
    %c0_i32 = arith.constant 0 : i32
    %c0_i32_0 = arith.constant 0 : i32
    %c0_i32_1 = arith.constant 0 : i32
    return %c0_i32, %c0_i32_0 : i32, i32
  }
  func.func @transform_1(%arg0: i32) -> (i32, i32) {
    %c0_i32 = arith.constant 0 : i32
    %c0_i32_0 = arith.constant 0 : i32
    return %arg0, %c0_i32 : i32, i32
  }
  func.func @transform_2(%arg0: i32) -> (i32, i32) {
    %c0_i32 = arith.constant 0 : i32
    %c0_i32_0 = arith.constant 0 : i32
    return %arg0, %c0_i32 : i32, i32
  }
}

</mosaic_0001>

<llo_original>
// kernel: tpu_custom_call.1
$region0: #{tpu_custom_call.1}
  #allocation0 [shape = 'u32[]', space=smem, size = 0x4, offset = 0x4, fixed_abs, tag = 'smem constant byte address 0x4 - core index']
  #allocation1 [shape = 'u32[144,128]{1,0:T(1,128)}', space=vmem, size = 0x12000, scoped, tag = 'internal scratch']
  #allocation2 [shape = 'f32[1,1]{1,0:T(1,128)S(6)}', space=smem, size = 0x200, scoped, tag = 'scoped memory for tpu_custom_call.1']
  %s0 = inlined_call_operand.<no memory space> [shape: f32[1,1], index: 0, kind: input, shape index: {}]
  %s1 = inlined_call_operand.hbm [shape: f32[1,2048], index: 1, kind: input, shape index: {}]
  %s2 = inlined_call_operand.hbm [shape: f32[1,2048], index: 2, kind: output, shape index: {}]
  %s3 = sld [smem:[#allocation0]]
  $region22: #{tpu_custom_call.1} parent=0
    _
  %s5 = ssub.s32 1, %s3
  %s6 = scalar_select 0, %s5, %s3
  %7 = sst [smem:[#allocation2]] %s0
  $region1: #{tpu_custom_call.1} parent=0
    #allocation3 [shape = 'u8[8192]{0}', space=vmem, size = 0x2000, scoped, tag = 'input window, operand 1, single buffered']
    #allocation4 [shape = 's32[1]{0}', space=sflag, size = 0x4, scoped, tag = 'scoped memory for tpu_custom_call.1']
    #allocation5 [shape = 's32[1]{0}', space=sflag, size = 0x4, scoped, tag = 'scoped memory for tpu_custom_call.1']
    #allocation6 [shape = 'u8[8192]{0}', space=vmem, size = 0x2000, scoped, tag = 'output window, operand 0, single buffered']
    %8 = vsyncpa [#allocation4], 0
    %9 = vsyncpa [#allocation5], 0
    // Predicated region
    $region2: #{tpu_custom_call.1} parent=1 // pred_check
      _
    $region3: #{tpu_custom_call.1} parent=1 // pred_check_branch
      %11 = sbr.rel (0) target = $region5
    $region4: #{tpu_custom_call.1} parent=1 // pred_region
      _
    $region5: #{tpu_custom_call.1} parent=1 // pred_fallthru
      _
    // Predicated region
    $region6: #{tpu_custom_call.1} parent=1 // pred_check
      _
    $region7: #{tpu_custom_call.1} parent=1 // pred_check_branch
      %13 = sbr.rel (0) target = $region9
    $region8: #{tpu_custom_call.1} parent=1 // pred_region
      %s15 = ssub.s32 256, 256
      %16 = vsyncadd [#allocation4], %s15
      %s18 = sshll.u32 [#allocation3], 4
      %s19 = int_to_ptr.vmem [resolvable:$true] %s18
      %21 = dma.hbm_to_vmem [thread:$0]  %s1, 256, %s19, [#allocation4]
    $region9: #{tpu_custom_call.1} parent=1 // pred_fallthru
      _
    // Predicated region
    $region10: #{tpu_custom_call.1} parent=1 // pred_check
      _
    $region11: #{tpu_custom_call.1} parent=1 // pred_check_branch
      %23 = sbr.rel (0) target = $region13
    $region12: #{tpu_custom_call.1} parent=1 // pred_region
      %24 = dma.done [#allocation4], 256
    $region13: #{tpu_custom_call.1} parent=1 // pred_fallthru
      _
    %s25 = sld [smem:[#allocation2]]
    %v26 = vld [vmem:[#allocation3] sm:$0xff]
    %v27 = vld [vmem:[#allocation3 + $0x8] sm:$0xff]
    %v28 = vstv %s25
    %v29 = vmul.f32 %v26, %v28
    %v30 = vmul.f32 %v27, %v28
    %31 = vst [vmem:[#allocation6] sm:$0xff] %v29
    %32 = vst [vmem:[#allocation6 + $0x8] sm:$0xff] %v30
    // Predicated region
    $region14: #{tpu_custom_call.1} parent=1 // pred_check
      _
    $region15: #{tpu_custom_call.1} parent=1 // pred_check_branch
      %34 = sbr.rel (0) target = $region17
    $region16: #{tpu_custom_call.1} parent=1 // pred_region
      %s36 = ssub.s32 256, 256
      %37 = vsyncadd [#allocation5], %s36
      %s39 = sshll.u32 [#allocation6], 4
      %s40 = int_to_ptr.vmem [resolvable:$true] %s39
      %42 = dma.vmem_to_hbm [thread:$0]  %s40, 256, %s2, [#allocation5]
    $region17: #{tpu_custom_call.1} parent=1 // pred_fallthru
      _
    // Predicated region
    $region18: #{tpu_custom_call.1} parent=1 // pred_check
      _
    $region19: #{tpu_custom_call.1} parent=1 // pred_check_branch
      %44 = sbr.rel (0) target = $region21
    $region20: #{tpu_custom_call.1} parent=1 // pred_region
      %45 = dma.done [#allocation5], 256
    $region21: #{tpu_custom_call.1} parent=1 // pred_fallthru
      _
    %46 = vsyncpa [#allocation4], 1
    %47 = vsyncpa [#allocation5], 1

</llo_original>
